<compile_context>
chip_gen: v7x
topology: tpu7x:2x2x1
jax: 0.10.0
libtpu: 0.0.40
codegen_flags: <defaults>
</compile_context>

<pallas_src>
from functools import partial

import jax
import jax.numpy as jnp
from jax.experimental import pallas as pl
from jax.experimental.pallas import tpu as pltpu

LANES = 128


def _cnn_kernel(tb, l_pad, x_ref, w_conv_ref, b_conv_ref, mask_ref,
                w_att_ref, b_att_ref, out_ref):
    """Fused conv(+bias, ReLU) -> masked max-pool -> linear for a batch tile.

    x_ref      : (tb*l_pad, K_total)  bf16  im2col activations (all widths)
    w_conv_ref : (K_total, nK*F)      bf16  block-diagonal conv weights
    b_conv_ref : (1, nK*F)            f32   concatenated conv biases
    mask_ref   : (tb*l_pad, nK*F)     f32   1.0 on valid rows, 0.0 on padding
    w_att_ref  : (nK*F, C_pad)        bf16  classifier weight (zero-padded)
    b_att_ref  : (1, C_pad)           f32
    out_ref    : (tb, C_pad)          f32
    """
    # One MXU push covers every kernel width and every tap (K = sum(k_i)*E).
    conv = jnp.dot(x_ref[...], w_conv_ref[...],
                   preferred_element_type=jnp.float32)       # (tb*l_pad, nK*F)
    conv = jnp.maximum(conv + b_conv_ref[...], 0.0) * mask_ref[...]

    # Global max-pool per batch element.  l_pad is a multiple of 8, so these
    # slices land on sublane boundaries (no relayout copies).
    feats = []
    for b in range(tb):
        seg = conv[b * l_pad:(b + 1) * l_pad, :]             # (l_pad, nK*F)
        feats.append(jnp.max(seg, axis=0, keepdims=True))    # (1, nK*F)
    feat = jnp.concatenate(feats, axis=0)                    # (tb, nK*F)

    logits = jnp.dot(feat.astype(w_att_ref.dtype), w_att_ref[...],
                     preferred_element_type=jnp.float32)     # (tb, C_pad)
    out_ref[...] = (logits + b_att_ref[...]).astype(out_ref.dtype)


def cnn_forward(emb, conv_ws, conv_bs, w_att, b_att, kernel_sizes,
                *, batch_tile=None):
    """emb: (B, S, E) f32 token embeddings.  Returns logits (B, C)."""
    B, S, E = emb.shape
    F = conv_ws[0].shape[-1]
    C = w_att.shape[-1]
    nK = len(kernel_sizes)
    nKF = nK * F

    tb = B if batch_tile is None else batch_tile
    assert B % tb == 0, "batch must be divisible by the batch tile"
    nb = B // tb

    lengths = [S - k + 1 for k in kernel_sizes]
    l_pad = ((max(lengths) + 7) // 8) * 8            # sublane-aligned pool rows
    c_pad = ((C + LANES - 1) // LANES) * LANES       # lane-dense output block

    # --- im2col in the wrapper: (B, l_pad, k*E) per width, concat along K ---
    cols = []
    for k in kernel_sizes:
        L = S - k + 1
        col = jnp.stack([emb[:, j:j + L, :] for j in range(k)], axis=2)
        col = col.reshape(B, L, k * E)
        col = jnp.pad(col, ((0, 0), (0, l_pad - L), (0, 0)))
        cols.append(col)
    xcol = jnp.concatenate(cols, axis=2).reshape(B * l_pad, -1)
    K_total = xcol.shape[1]
    xcol = xcol.astype(jnp.bfloat16)

    # --- block-diagonal conv weight (K_total, nK*F) + concatenated bias -----
    w_conv = jnp.zeros((K_total, nKF), jnp.float32)
    off = 0
    for i, k in enumerate(kernel_sizes):
        w_flat = conv_ws[i].reshape(k * E, F)
        w_conv = w_conv.at[off:off + k * E, i * F:(i + 1) * F].set(w_flat)
        off += k * E
    w_conv = w_conv.astype(jnp.bfloat16)
    b_conv = jnp.concatenate([b.reshape(1, F) for b in conv_bs], axis=1)

    # --- validity mask: padded rows -> 0 after ReLU -------------------------
    row = jnp.arange(tb * l_pad, dtype=jnp.int32) % l_pad
    valid = jnp.repeat(jnp.asarray(lengths, jnp.int32), F)        # (nK*F,)
    mask = (row[:, None] < valid[None, :]).astype(jnp.float32)    # (tb*l_pad, nKF)

    # --- classifier, zero-padded to a lane-dense (128-wide) output ----------
    w_att_p = jnp.zeros((nKF, c_pad), jnp.float32).at[:, :C].set(w_att)
    w_att_p = w_att_p.astype(jnp.bfloat16)
    b_att_p = jnp.zeros((1, c_pad), jnp.float32).at[:, :C].set(b_att)

    kernel = partial(_cnn_kernel, tb, l_pad)
    out = pl.pallas_call(
        kernel,
        out_shape=jax.ShapeDtypeStruct((B, c_pad), jnp.float32),
        grid=(nb,),
        in_specs=[
            pl.BlockSpec((tb * l_pad, K_total), lambda i: (i, 0)),
            pl.BlockSpec((K_total, nKF), lambda i: (0, 0)),
            pl.BlockSpec((1, nKF), lambda i: (0, 0)),
            pl.BlockSpec((tb * l_pad, nKF), lambda i: (0, 0)),
            pl.BlockSpec((nKF, c_pad), lambda i: (0, 0)),
            pl.BlockSpec((1, c_pad), lambda i: (0, 0)),
        ],
        out_specs=pl.BlockSpec((tb, c_pad), lambda i: (i, 0)),
        compiler_params=pltpu.CompilerParams(
            dimension_semantics=("parallel",)),
    )(xcol, w_conv, b_conv, mask, w_att_p, b_att_p)
    return out[:, :C]


def reference_forward(emb, conv_ws, conv_bs, w_att, b_att, kernel_sizes):
    """Plain-JAX reference with matching bf16-operand / f32-accum numerics."""
    B, S, E = emb.shape
    emb_bf = emb.astype(jnp.bfloat16)
    feats = []
    for i, k in enumerate(kernel_sizes):
        L = S - k + 1
        F = conv_ws[i].shape[-1]
        w = conv_ws[i].astype(jnp.bfloat16)
        acc = jnp.zeros((B, L, F), jnp.float32)
        for j in range(k):
            acc = acc + jnp.einsum('bse,ef->bsf', emb_bf[:, j:j + L, :], w[j],
                                   preferred_element_type=jnp.float32)
        acc = jnp.maximum(acc + conv_bs[i][None], 0.0)
        feats.append(jnp.max(acc, axis=1))
    feat = jnp.concatenate(feats, axis=1)
    logits = jnp.dot(feat.astype(jnp.bfloat16), w_att.astype(jnp.bfloat16),
                     preferred_element_type=jnp.float32)
    return logits + b_att


if __name__ == "__main__":
    # Module hyperparameters (small, consistent with the PyTorch __init__).
    vocab_size = 50
    embedding_dim = 32
    filter_amount = 8
    kernel_sizes = (3, 4, 5)
    classes_amount = 4
    pad_idx = 0
    ste = 'none'          # skip the BinaryNeuron/STE branch
    batch, seq_len = 2, 16

    key = jax.random.PRNGKey(0)
    k_emb, k_tok, *k_conv = jax.random.split(key, 2 + len(kernel_sizes))
    k_att_w, k_att_b = jax.random.split(k_conv[-1], 2)

    # Embedding table; padding_idx row is zeroed (as in nn.Embedding).
    emb_table = jax.random.normal(k_emb, (vocab_size, embedding_dim),
                                  jnp.float32) * 0.1
    emb_table = emb_table.at[pad_idx].set(0.0)

    # Token ids (B, S), including some padding tokens.
    text = jax.random.randint(k_tok, (batch, seq_len), 0, vocab_size)
    text = text.at[:, -2:].set(pad_idx)

    # Conv parameters: stored pre-transposed as (k, E, F); bias (1, F).
    conv_ws, conv_bs = [], []
    for i, ksz in enumerate(kernel_sizes):
        kw, kb = jax.random.split(k_conv[i], 2)
        conv_ws.append(jax.random.normal(
            kw, (ksz, embedding_dim, filter_amount), jnp.float32) * 0.1)
        conv_bs.append(jax.random.normal(
            kb, (1, filter_amount), jnp.float32) * 0.1)

    # Classifier ("attention" Linear): (nK*F, C) pre-transposed; bias (1, C).
    w_att = jax.random.normal(
        k_att_w, (len(kernel_sizes) * filter_amount, classes_amount),
        jnp.float32) * 0.1
    b_att = jax.random.normal(k_att_b, (1, classes_amount), jnp.float32) * 0.1

    # Glue: embedding lookup in plain JAX (gather), then the fused kernel.
    embeddings = emb_table[text]            # (B, S, E)

    logits = cnn_forward(embeddings, conv_ws, conv_bs, w_att, b_att,
                         kernel_sizes)
    logits = jax.block_until_ready(logits)

    ref = reference_forward(embeddings, conv_ws, conv_bs, w_att, b_att,
                            kernel_sizes)
    assert logits.shape == (batch, classes_amount)
    assert jnp.allclose(logits, ref, rtol=2e-3, atol=2e-3), "mismatch vs ref"

    print("KERNEL_OK")
</pallas_src>

<mosaic_0001>
module attributes {stable_mosaic.version = 11 : i64} {
  func.func @_cnn_kernel(%arg0: i32, %arg1: memref<32x384xbf16, #tpu.memory_space<vmem>>, %arg2: memref<384x24xbf16, #tpu.memory_space<vmem>>, %arg3: memref<1x24xf32, #tpu.memory_space<vmem>>, %arg4: memref<32x24xf32, #tpu.memory_space<vmem>>, %arg5: memref<24x128xbf16, #tpu.memory_space<vmem>>, %arg6: memref<1x128xf32, #tpu.memory_space<vmem>>, %arg7: memref<2x128xf32, #tpu.memory_space<vmem>>) attributes {dimension_semantics = [#tpu.dimension_semantics<parallel>], iteration_bounds = array<i64: 1>, scalar_prefetch = 0 : i64, scratch_operands = 0 : i64, tpu.core_type = #tpu.core_type<tc>, window_params = [{transform_indices = @transform_0, window_bounds = array<i64: 32, 384>}, {pipeline_mode = #tpu.pipeline_mode<synchronous>, transform_indices = @transform_1, window_bounds = array<i64: 384, 24>}, {pipeline_mode = #tpu.pipeline_mode<synchronous>, transform_indices = @transform_2, window_bounds = array<i64: 1, 24>}, {pipeline_mode = #tpu.pipeline_mode<synchronous>, transform_indices = @transform_3, window_bounds = array<i64: 32, 24>}, {pipeline_mode = #tpu.pipeline_mode<synchronous>, transform_indices = @transform_4, window_bounds = array<i64: 24, 128>}, {pipeline_mode = #tpu.pipeline_mode<synchronous>, transform_indices = @transform_5, window_bounds = array<i64: 1, 128>}, {transform_indices = @transform_6, window_bounds = array<i64: 2, 128>}]} {
    %c0 = arith.constant 0 : index
    %c0_0 = arith.constant 0 : index
    %0 = vector.load %arg1[%c0, %c0_0] : memref<32x384xbf16, #tpu.memory_space<vmem>>, vector<32x384xbf16>
    %c0_1 = arith.constant 0 : index
    %c0_2 = arith.constant 0 : index
    %1 = vector.load %arg2[%c0_1, %c0_2] : memref<384x24xbf16, #tpu.memory_space<vmem>>, vector<384x24xbf16>
    %cst = arith.constant dense<0.000000e+00> : vector<32x24xf32>
    %2 = tpu.matmul %0, %1, %cst {dimension_numbers = #tpu.dot_dimension_numbers<[1], [0], [0], [1], [0, 0, 1, 1], [], []>} : vector<32x384xbf16>, vector<384x24xbf16>, vector<32x24xf32> -> vector<32x24xf32>
    %c0_3 = arith.constant 0 : index
    %c0_4 = arith.constant 0 : index
    %3 = vector.load %arg3[%c0_3, %c0_4] : memref<1x24xf32, #tpu.memory_space<vmem>>, vector<1x24xf32>
    %4 = vector.broadcast %3 : vector<1x24xf32> to vector<32x24xf32>
    %5 = arith.addf %2, %4 : vector<32x24xf32>
    %cst_5 = arith.constant 0.000000e+00 : f32
    %6 = vector.broadcast %cst_5 : f32 to vector<32x24xf32>
    %7 = arith.maximumf %5, %6 : vector<32x24xf32>
    %c0_6 = arith.constant 0 : index
    %c0_7 = arith.constant 0 : index
    %8 = vector.load %arg4[%c0_6, %c0_7] : memref<32x24xf32, #tpu.memory_space<vmem>>, vector<32x24xf32>
    %9 = arith.mulf %7, %8 : vector<32x24xf32>
    %10 = vector.extract_strided_slice %9 {offsets = [0, 0], sizes = [16, 24], strides = [1, 1]} : vector<32x24xf32> to vector<16x24xf32>
    %cst_8 = arith.constant dense<0xFF800000> : vector<24xf32>
    %11 = vector.multi_reduction <maximumf>, %10, %cst_8 [0] : vector<16x24xf32> to vector<24xf32>
    %12 = vector.shape_cast %11 : vector<24xf32> to vector<1x24xf32>
    %13 = vector.extract_strided_slice %9 {offsets = [16, 0], sizes = [16, 24], strides = [1, 1]} : vector<32x24xf32> to vector<16x24xf32>
    %cst_9 = arith.constant dense<0xFF800000> : vector<24xf32>
    %14 = vector.multi_reduction <maximumf>, %13, %cst_9 [0] : vector<16x24xf32> to vector<24xf32>
    %15 = vector.shape_cast %14 : vector<24xf32> to vector<1x24xf32>
    %16 = tpu.concatenate %12, %15 in 0 : vector<1x24xf32>, vector<1x24xf32> -> vector<2x24xf32>
    %17 = arith.truncf %16 : vector<2x24xf32> to vector<2x24xbf16>
    %c0_10 = arith.constant 0 : index
    %c0_11 = arith.constant 0 : index
    %18 = vector.load %arg5[%c0_10, %c0_11] : memref<24x128xbf16, #tpu.memory_space<vmem>>, vector<24x128xbf16>
    %cst_12 = arith.constant dense<0.000000e+00> : vector<2x128xf32>
    %19 = tpu.matmul %17, %18, %cst_12 {dimension_numbers = #tpu.dot_dimension_numbers<[1], [0], [0], [1], [0, 0, 1, 1], [], []>} : vector<2x24xbf16>, vector<24x128xbf16>, vector<2x128xf32> -> vector<2x128xf32>
    %c0_13 = arith.constant 0 : index
    %c0_14 = arith.constant 0 : index
    %20 = vector.load %arg6[%c0_13, %c0_14] : memref<1x128xf32, #tpu.memory_space<vmem>>, vector<1x128xf32>
    %21 = vector.broadcast %20 : vector<1x128xf32> to vector<2x128xf32>
    %22 = arith.addf %19, %21 : vector<2x128xf32>
    %c0_15 = arith.constant 0 : index
    %c0_16 = arith.constant 0 : index
    %23 = vector.load %arg7[%c0_15, %c0_16] : memref<2x128xf32, #tpu.memory_space<vmem>>, vector<2x128xf32>
    tpu.vector_store %arg7[%c0_15, %c0_16], %22 {strides = array<i32>} : memref<2x128xf32, #tpu.memory_space<vmem>>, vector<2x128xf32>,
    return
  }
  func.func @transform_0(%arg0: i32) -> (i32, i32) {
    %c0_i32 = arith.constant 0 : i32
    %c0_i32_0 = arith.constant 0 : i32
    return %arg0, %c0_i32 : i32, i32
  }
  func.func @transform_1(%arg0: i32) -> (i32, i32) {
    %c0_i32 = arith.constant 0 : i32
    %c0_i32_0 = arith.constant 0 : i32
    %c0_i32_1 = arith.constant 0 : i32
    return %c0_i32, %c0_i32_0 : i32, i32
  }
  func.func @transform_2(%arg0: i32) -> (i32, i32) {
    %c0_i32 = arith.constant 0 : i32
    %c0_i32_0 = arith.constant 0 : i32
    %c0_i32_1 = arith.constant 0 : i32
    return %c0_i32, %c0_i32_0 : i32, i32
  }
  func.func @transform_3(%arg0: i32) -> (i32, i32) {
    %c0_i32 = arith.constant 0 : i32
    %c0_i32_0 = arith.constant 0 : i32
    %c0_i32_1 = arith.constant 0 : i32
    return %c0_i32, %c0_i32_0 : i32, i32
  }
  func.func @transform_4(%arg0: i32) -> (i32, i32) {
    %c0_i32 = arith.constant 0 : i32
    %c0_i32_0 = arith.constant 0 : i32
    %c0_i32_1 = arith.constant 0 : i32
    return %c0_i32, %c0_i32_0 : i32, i32
  }
  func.func @transform_5(%arg0: i32) -> (i32, i32) {
    %c0_i32 = arith.constant 0 : i32
    %c0_i32_0 = arith.constant 0 : i32
    %c0_i32_1 = arith.constant 0 : i32
    return %c0_i32, %c0_i32_0 : i32, i32
  }
  func.func @transform_6(%arg0: i32) -> (i32, i32) {
    %c0_i32 = arith.constant 0 : i32
    %c0_i32_0 = arith.constant 0 : i32
    return %arg0, %c0_i32 : i32, i32
  }
}

</mosaic_0001>

<llo_original>
// kernel: tpu_custom_call.1
$region0: #{tpu_custom_call.1}
  #allocation0 [shape = 'u32[]', space=smem, size = 0x4, offset = 0x4, fixed_abs, tag = 'smem constant byte address 0x4 - core index']
  #allocation1 [shape = 'u32[144,128]{1,0:T(1,128)}', space=vmem, size = 0x12000, scoped, tag = 'internal scratch']
  %s0 = inlined_call_operand.vmem [shape: bf16[32,384], index: 0, kind: input, shape index: {}]
  %s1 = inlined_call_operand.vmem [shape: bf16[384,24], index: 1, kind: input, shape index: {}]
  %s2 = inlined_call_operand.vmem [shape: f32[1,24], index: 2, kind: input, shape index: {}]
  %s3 = inlined_call_operand.vmem [shape: f32[32,24], index: 3, kind: input, shape index: {}]
  %s4 = inlined_call_operand.vmem [shape: bf16[24,128], index: 4, kind: input, shape index: {}]
  %s5 = inlined_call_operand.vmem [shape: f32[1,128], index: 5, kind: input, shape index: {}]
  %s6 = inlined_call_operand.hbm [shape: f32[2,128], index: 6, kind: output, shape index: {}]
  %s7 = sld [smem:[#allocation0]]
  $region34: #{tpu_custom_call.1} parent=0
    _
  %s9 = ssub.s32 1, %s7
  %s10 = scalar_select 0, %s9, %s7
  $region1: #{tpu_custom_call.1} parent=0
    #allocation2 [shape = 'u8[1024]{0}', space=vmem, size = 0x400, scoped, tag = 'output window, operand 0, single buffered']
    #allocation3 [shape = 's32[1]{0}', space=sflag, size = 0x4, scoped, tag = 'scoped memory for tpu_custom_call.1']
    %11 = vsyncpa [#allocation3], 0
    // Predicated region
    $region2: #{tpu_custom_call.1} parent=1 // pred_check
      _
    $region3: #{tpu_custom_call.1} parent=1 // pred_check_branch
      %13 = sbr.rel (0) target = $region5
    $region4: #{tpu_custom_call.1} parent=1 // pred_region
      _
    $region5: #{tpu_custom_call.1} parent=1 // pred_fallthru
      _
    // Predicated region
    $region6: #{tpu_custom_call.1} parent=1 // pred_check
      _
    $region7: #{tpu_custom_call.1} parent=1 // pred_check_branch
      %15 = sbr.rel (0) target = $region9
    $region8: #{tpu_custom_call.1} parent=1 // pred_region
      _
    $region9: #{tpu_custom_call.1} parent=1 // pred_fallthru
      _
    // Predicated region
    $region10: #{tpu_custom_call.1} parent=1 // pred_check
      _
    $region11: #{tpu_custom_call.1} parent=1 // pred_check_branch
      %17 = sbr.rel (0) target = $region13
    $region12: #{tpu_custom_call.1} parent=1 // pred_region
      _
    $region13: #{tpu_custom_call.1} parent=1 // pred_fallthru
      _
    // Predicated region
    $region14: #{tpu_custom_call.1} parent=1 // pred_check
      _
    $region15: #{tpu_custom_call.1} parent=1 // pred_check_branch
      %19 = sbr.rel (0) target = $region17
    $region16: #{tpu_custom_call.1} parent=1 // pred_region
      _
    $region17: #{tpu_custom_call.1} parent=1 // pred_fallthru
      _
    // Predicated region
    $region18: #{tpu_custom_call.1} parent=1 // pred_check
      _
    $region19: #{tpu_custom_call.1} parent=1 // pred_check_branch
      %21 = sbr.rel (0) target = $region21
    $region20: #{tpu_custom_call.1} parent=1 // pred_region
      _
    $region21: #{tpu_custom_call.1} parent=1 // pred_fallthru
      _
    // Predicated region
    $region22: #{tpu_custom_call.1} parent=1 // pred_check
      _
    $region23: #{tpu_custom_call.1} parent=1 // pred_check_branch
      %23 = sbr.rel (0) target = $region25
    $region24: #{tpu_custom_call.1} parent=1 // pred_region
      _
    $region25: #{tpu_custom_call.1} parent=1 // pred_fallthru
      _
    %v25 = vld [vmem:[%s0] sm:$0xff]
    %v26 = vld [vmem:[%s0 + $0x8] sm:$0xf]
    %v27 = vld [vmem:[%s0 + $0xc] sm:$0xff]
    %v28 = vld [vmem:[%s0 + $0x14] sm:$0xf]
    %v29 = vld [vmem:[%s0 + $0x18] sm:$0xff]
    %v30 = vld [vmem:[%s0 + $0x20] sm:$0xf]
    %v31 = vld [vmem:[%s0 + $0x24] sm:$0xff]
    %v32 = vld [vmem:[%s0 + $0x2c] sm:$0xf]
    %v33 = vld [vmem:[%s1] sm:$0xf]
    %v34 = vld [vmem:[%s1 + $0x4] sm:$0xf]
    %v35 = vld [vmem:[%s1 + $0x8] sm:$0xf]
    %v36 = vld [vmem:[%s1 + $0xc] sm:$0xf]
    %v37 = vld [vmem:[%s1 + $0x10] sm:$0xf]
    %v38 = vld [vmem:[%s1 + $0x14] sm:$0xf]
    %v39 = vld [vmem:[%s1 + $0x18] sm:$0xf]
    %v40 = vld [vmem:[%s1 + $0x1c] sm:$0xf]
    %v41 = vld [vmem:[%s1 + $0x20] sm:$0xf]
    %v42 = vld [vmem:[%s1 + $0x24] sm:$0xf]
    %v43 = vld [vmem:[%s1 + $0x28] sm:$0xf]
    %v44 = vld [vmem:[%s1 + $0x2c] sm:$0xf]
    %v45 = vld [vmem:[%s1 + $0x30] sm:$0xf]
    %v46 = vld [vmem:[%s1 + $0x34] sm:$0xf]
    %v47 = vld [vmem:[%s1 + $0x38] sm:$0xf]
    %v48 = vld [vmem:[%s1 + $0x3c] sm:$0xf]
    %v49 = vld [vmem:[%s1 + $0x40] sm:$0xf]
    %v50 = vld [vmem:[%s1 + $0x44] sm:$0xf]
    %v51 = vld [vmem:[%s1 + $0x48] sm:$0xf]
    %v52 = vld [vmem:[%s1 + $0x4c] sm:$0xf]
    %v53 = vld [vmem:[%s1 + $0x50] sm:$0xf]
    %v54 = vld [vmem:[%s1 + $0x54] sm:$0xf]
    %v55 = vld [vmem:[%s1 + $0x58] sm:$0xf]
    %v56 = vld [vmem:[%s1 + $0x5c] sm:$0xf]
    %v57 = vld [vmem:[%s1 + $0x60] sm:$0xf]
    %v58 = vld [vmem:[%s1 + $0x64] sm:$0xf]
    %v59 = vld [vmem:[%s1 + $0x68] sm:$0xf]
    %v60 = vld [vmem:[%s1 + $0x6c] sm:$0xf]
    %v61 = vld [vmem:[%s1 + $0x70] sm:$0xf]
    %v62 = vld [vmem:[%s1 + $0x74] sm:$0xf]
    %v63 = vld [vmem:[%s1 + $0x78] sm:$0xf]
    %v64 = vld [vmem:[%s1 + $0x7c] sm:$0xf]
    %v65 = vld [vmem:[%s1 + $0x80] sm:$0xf]
    %v66 = vld [vmem:[%s1 + $0x84] sm:$0xf]
    %v67 = vld [vmem:[%s1 + $0x88] sm:$0xf]
    %v68 = vld [vmem:[%s1 + $0x8c] sm:$0xf]
    %v69 = vld [vmem:[%s1 + $0x90] sm:$0xf]
    %v70 = vld [vmem:[%s1 + $0x94] sm:$0xf]
    %v71 = vld [vmem:[%s1 + $0x98] sm:$0xf]
    %v72 = vld [vmem:[%s1 + $0x9c] sm:$0xf]
    %v73 = vld [vmem:[%s1 + $0xa0] sm:$0xf]
    %v74 = vld [vmem:[%s1 + $0xa4] sm:$0xf]
    %v75 = vld [vmem:[%s1 + $0xa8] sm:$0xf]
    %v76 = vld [vmem:[%s1 + $0xac] sm:$0xf]
    %v77 = vld [vmem:[%s1 + $0xb0] sm:$0xf]
    %v78 = vld [vmem:[%s1 + $0xb4] sm:$0xf]
    %v79 = vld [vmem:[%s1 + $0xb8] sm:$0xf]
    %v80 = vld [vmem:[%s1 + $0xbc] sm:$0xf]
    %v81 = vld [vmem:[%s2] sm:$0x1]
    %v83 = vlaneseq
    %v84 = vshrl.u32 %v83, 7
    %v85 = vsub.s32 0, %v84
    %v86 = vrot.slane %v81, %v85
    %v96 = vunpack.c.l.b16 %v25
    %v97 = vunpack.c.h.b16 %v25
    %v98 = vunpack.c.l.b16 %v26
    %v99 = vunpack.c.l.b16 %v27
    %v100 = vunpack.c.h.b16 %v27
    %v101 = vunpack.c.l.b16 %v28
    %v102 = vunpack.c.l.b16 %v29
    %v103 = vunpack.c.h.b16 %v29
    %v104 = vunpack.c.l.b16 %v30
    %v105 = vunpack.c.l.b16 %v31
    %v106 = vunpack.c.h.b16 %v31
    %v107 = vunpack.c.l.b16 %v32
    %v108 = vpack.c.b16 %v99, %v96
    %v109 = vpack.c.b16 %v100, %v97
    %v110 = vpack.c.b16 %v101, %v98
    %v111 = vpack.c.b16 %v105, %v102
    %v112 = vpack.c.b16 %v106, %v103
    %v113 = vpack.c.b16 %v107, %v104
    %v168 = vunpack.c.l.b16 %v33
    %v169 = vunpack.c.l.b16 %v34
    %v170 = vunpack.c.l.b16 %v35
    %v171 = vunpack.c.l.b16 %v36
    %v172 = vunpack.c.l.b16 %v37
    %v173 = vunpack.c.l.b16 %v38
    %v174 = vunpack.c.l.b16 %v39
    %v175 = vunpack.c.l.b16 %v40
    %v176 = vunpack.c.l.b16 %v41
    %v177 = vunpack.c.l.b16 %v42
    %v178 = vunpack.c.l.b16 %v43
    %v179 = vunpack.c.l.b16 %v44
    %v180 = vunpack.c.l.b16 %v45
    %v181 = vunpack.c.l.b16 %v46
    %v182 = vunpack.c.l.b16 %v47
    %v183 = vunpack.c.l.b16 %v48
    %v184 = vunpack.c.l.b16 %v49
    %v185 = vunpack.c.l.b16 %v50
    %v186 = vunpack.c.l.b16 %v51
    %v187 = vunpack.c.l.b16 %v52
    %v188 = vunpack.c.l.b16 %v53
    %v189 = vunpack.c.l.b16 %v54
    %v190 = vunpack.c.l.b16 %v55
    %v191 = vunpack.c.l.b16 %v56
    %v192 = vunpack.c.l.b16 %v57
    %v193 = vunpack.c.l.b16 %v58
    %v194 = vunpack.c.l.b16 %v59
    %v195 = vunpack.c.l.b16 %v60
    %v196 = vunpack.c.l.b16 %v61
    %v197 = vunpack.c.l.b16 %v62
    %v198 = vunpack.c.l.b16 %v63
    %v199 = vunpack.c.l.b16 %v64
    %v200 = vunpack.c.l.b16 %v65
    %v201 = vunpack.c.l.b16 %v66
    %v202 = vunpack.c.l.b16 %v67
    %v203 = vunpack.c.l.b16 %v68
    %v204 = vunpack.c.l.b16 %v69
    %v205 = vunpack.c.l.b16 %v70
    %v206 = vunpack.c.l.b16 %v71
    %v207 = vunpack.c.l.b16 %v72
    %v208 = vunpack.c.l.b16 %v73
    %v209 = vunpack.c.l.b16 %v74
    %v210 = vunpack.c.l.b16 %v75
    %v211 = vunpack.c.l.b16 %v76
    %v212 = vunpack.c.l.b16 %v77
    %v213 = vunpack.c.l.b16 %v78
    %v214 = vunpack.c.l.b16 %v79
    %v215 = vunpack.c.l.b16 %v80
    %v216 = vpack.c.b16 %v169, %v168
    %v217 = vpack.c.b16 %v171, %v170
    %v218 = vpack.c.b16 %v173, %v172
    %v219 = vpack.c.b16 %v175, %v174
    %v220 = vpack.c.b16 %v177, %v176
    %v221 = vpack.c.b16 %v179, %v178
    %v222 = vpack.c.b16 %v181, %v180
    %v223 = vpack.c.b16 %v183, %v182
    %v224 = vpack.c.b16 %v185, %v184
    %v225 = vpack.c.b16 %v187, %v186
    %v226 = vpack.c.b16 %v189, %v188
    %v227 = vpack.c.b16 %v191, %v190
    %v228 = vpack.c.b16 %v193, %v192
    %v229 = vpack.c.b16 %v195, %v194
    %v230 = vpack.c.b16 %v197, %v196
    %v231 = vpack.c.b16 %v199, %v198
    %v232 = vpack.c.b16 %v201, %v200
    %v233 = vpack.c.b16 %v203, %v202
    %v234 = vpack.c.b16 %v205, %v204
    %v235 = vpack.c.b16 %v207, %v206
    %v236 = vpack.c.b16 %v209, %v208
    %v237 = vpack.c.b16 %v211, %v210
    %v238 = vpack.c.b16 %v213, %v212
    %v239 = vpack.c.b16 %v215, %v214
    %264 = vmatprep.subr.bf16.mxu0 0
    %265 = vmatpush1.bf16.msra.mxu0 %v216
    %266 = vmatprep.subr.bf16.mxu0 0
    %267 = vmatpush1.bf16.msra.mxu0 %v217
    %268 = vmatprep.subr.bf16.mxu0 0
    %269 = vmatpush1.bf16.msra.mxu0 %v218
    %270 = vmatprep.subr.bf16.mxu0 0
    %271 = vmatpush1.bf16.msra.mxu0 %v219
    %272 = vmatprep.subr.bf16.mxu0 0
    %273 = vmatpush1.bf16.msra.mxu0 %v220
    %274 = vmatprep.subr.bf16.mxu0 0
    %275 = vmatpush1.bf16.msra.mxu0 %v221
    %276 = vmatprep.subr.bf16.mxu0 0
    %277 = vmatpush1.bf16.msra.mxu0 %v222
    %278 = vmatprep.subr.bf16.mxu0 0
    %279 = vmatpush1.bf16.msra.mxu0 %v223
    %280 = vmatprep.subr.bf16.mxu0 0
    %281 = vmatpush1.bf16.msra.mxu0 %v224
    %282 = vmatprep.subr.bf16.mxu0 0
    %283 = vmatpush1.bf16.msra.mxu0 %v225
    %284 = vmatprep.subr.bf16.mxu0 0
    %285 = vmatpush1.bf16.msra.mxu0 %v226
    %286 = vmatprep.subr.bf16.mxu0 0
    %287 = vmatpush1.bf16.msra.mxu0 %v227
    %288 = vmatprep.subr.bf16.mxu0 0
    %289 = vmatpush1.bf16.msra.mxu0 %v228
    %290 = vmatprep.subr.bf16.mxu0 0
    %291 = vmatpush1.bf16.msra.mxu0 %v229
    %292 = vmatprep.subr.bf16.mxu0 0
    %293 = vmatpush1.bf16.msra.mxu0 %v230
    %294 = vmatprep.subr.bf16.mxu0 0
    %295 = vmatpush1.bf16.msra.mxu0 %v231
    %296 = vmatprep.mubr.bf16.mxu0 %v109
    %297 = vmatmul.mubr.bf16.gmra.mrb[0].mxu0 %v108
    %v298 = vpop.f32.mrb[0].mxu0
    %v299 = vadd.f32 %v86, %v298
    %v300 = vpop.f32.mrb[0].mxu0
    %v301 = vpop.f32.mrb[0].mxu0
    %v302 = vadd.f32 %v86, %v301
    %v303 = vpop.f32.mrb[0].mxu0
    %304 = vmatprep.mubr.bf16.mxu0 %v112
    %305 = vmatmul.mubr.bf16.gmra.mrb[0].mxu0 %v111
    %v306 = vpop.f32.mrb[0].mxu0
    %v307 = vadd.f32 %v86, %v306
    %v308 = vpop.f32.mrb[0].mxu0
    %v309 = vpop.f32.mrb[0].mxu0
    %v310 = vadd.f32 %v86, %v309
    %v311 = vpop.f32.mrb[0].mxu0
    %312 = vdwg.mxu0
    %313 = vmatprep.subr.bf16.mxu0 0
    %314 = vmatpush1.bf16.msra.mxu0 %v232
    %315 = vmatprep.subr.bf16.mxu0 0
    %316 = vmatpush1.bf16.msra.mxu0 %v233
    %317 = vmatprep.subr.bf16.mxu0 0
    %318 = vmatpush1.bf16.msra.mxu0 %v234
    %319 = vmatprep.subr.bf16.mxu0 0
    %320 = vmatpush1.bf16.msra.mxu0 %v235
    %321 = vmatprep.subr.bf16.mxu0 0
    %322 = vmatpush1.bf16.msra.mxu0 %v236
    %323 = vmatprep.subr.bf16.mxu0 0
    %324 = vmatpush1.bf16.msra.mxu0 %v237
    %325 = vmatprep.subr.bf16.mxu0 0
    %326 = vmatpush1.bf16.msra.mxu0 %v238
    %327 = vmatprep.subr.bf16.mxu0 0
    %328 = vmatpush1.bf16.msra.mxu0 %v239
    %329 = vmatprep.subr.bf16.mxu0 0
    %330 = vmatpush1.bf16.msra.mxu0 0
    %331 = vmatprep.subr.bf16.mxu0 0
    %332 = vmatpush1.bf16.msra.mxu0 0
    %333 = vmatprep.subr.bf16.mxu0 0
    %334 = vmatpush1.bf16.msra.mxu0 0
    %335 = vmatprep.subr.bf16.mxu0 0
    %336 = vmatpush1.bf16.msra.mxu0 0
    %337 = vmatprep.subr.bf16.mxu0 0
    %338 = vmatpush1.bf16.msra.mxu0 0
    %339 = vmatprep.subr.bf16.mxu0 0
    %340 = vmatpush1.bf16.msra.mxu0 0
    %341 = vmatprep.subr.bf16.mxu0 0
    %342 = vmatpush1.bf16.msra.mxu0 0
    %343 = vmatprep.subr.bf16.mxu0 0
    %344 = vmatpush1.bf16.msra.mxu0 0
    %345 = vmatprep.mubr.bf16.mxu0 0
    %346 = vmatmul.mubr.bf16.gmra.mrb[0].mxu0 %v110
    %v347 = vpop.f32.mrb[0].mxu0
    %v348 = vadd.f32 %v299, %v347
    %v349 = vpop.f32.mrb[0].mxu0
    %v350 = vpop.f32.mrb[0].mxu0
    %v351 = vadd.f32 %v302, %v350
    %v352 = vpop.f32.mrb[0].mxu0
    %353 = vmatprep.mubr.bf16.mxu0 0
    %354 = vmatmul.mubr.bf16.gmra.mrb[0].mxu0 %v113
    %v355 = vpop.f32.mrb[0].mxu0
    %v356 = vadd.f32 %v307, %v355
    %v357 = vpop.f32.mrb[0].mxu0
    %v358 = vpop.f32.mrb[0].mxu0
    %v359 = vadd.f32 %v310, %v358
    %v360 = vpop.f32.mrb[0].mxu0
    %361 = vdwg.mxu0
    %v362 = vmax.f32 %v348, 0.0
    %v363 = vmax.f32 %v351, 0.0
    %v364 = vmax.f32 %v356, 0.0
    %v365 = vmax.f32 %v359, 0.0
    %v366 = vld [vmem:[%s3] sm:$0xff]
    %v367 = vld [vmem:[%s3 + $0x8] sm:$0xff]
    %v368 = vld [vmem:[%s3 + $0x10] sm:$0xff]
    %v369 = vld [vmem:[%s3 + $0x18] sm:$0xff]
    %v370 = vmul.f32 %v362, %v366
    %v371 = vmul.f32 %v363, %v367
    %v372 = vmul.f32 %v364, %v368
    %v373 = vmul.f32 %v365, %v369
    %vm374 = vcmask 195584
    %v375 = vsel %vm374, %v370, -inf
    %v376 = vsel %vm374, %v371, -inf
    %v377 = vmax.f32 %v375, %v376
    %v378 = vrot.slane %v377, 4
    %v379 = vmax.f32 %v377, %v378
    %v380 = vrot.slane %v379, 2
    %v381 = vmax.f32 %v379, %v380
    %v382 = vrot.slane %v381, 1
    %v383 = vmax.f32 %v381, %v382
    %v384 = vsel %vm374, %v372, -inf
    %v385 = vsel %vm374, %v373, -inf
    %v386 = vmax.f32 %v384, %v385
    %v387 = vrot.slane %v386, 4
    %v388 = vmax.f32 %v386, %v387
    %v389 = vrot.slane %v388, 2
    %v390 = vmax.f32 %v388, %v389
    %v391 = vrot.slane %v390, 1
    %v392 = vmax.f32 %v390, %v391
    %vm393 = vcmask 1040384
    %v394 = vsel %vm393, %v383, %v392
    %v395 = vpack.c.bf16 %v394, %v394
    %v396 = vld [vmem:[%s4] sm:$0xf]
    %v397 = vld [vmem:[%s4 + $0x4] sm:$0xf]
    %v398 = vld [vmem:[%s4 + $0x8] sm:$0xf]
    %v399 = vld [vmem:[%s5] sm:$0x1]
    %v401 = vlaneseq
    %v402 = vshrl.u32 %v401, 7
    %v403 = vsub.s32 0, %v402
    %v404 = vrot.slane %v399, %v403
    %v409 = vunpack.c.l.b16 %v396
    %v410 = vunpack.c.l.b16 %v397
    %v411 = vunpack.c.l.b16 %v398
    %v412 = vpack.c.b16 %v410, %v409
    %v413 = vpack.c.b16 %v411, %v411
    %v416 = vsel %vm374, %v395, 0
    %vm418 = vcmask 1043456
    %v420 = vsel %vm418, %v413, 0
    %422 = vmatprep.subr.bf16.mxu0 0
    %423 = vmatpush1.bf16.msra.mxu0 %v412
    %424 = vmatprep.subr.bf16.mxu0 0
    %425 = vmatpush1.bf16.msra.mxu0 %v420
    %426 = vmatprep.subr.bf16.mxu0 0
    %427 = vmatpush1.bf16.msra.mxu0 0
    %428 = vmatprep.subr.bf16.mxu0 0
    %429 = vmatpush1.bf16.msra.mxu0 0
    %430 = vmatprep.subr.bf16.mxu0 0
    %431 = vmatpush1.bf16.msra.mxu0 0
    %432 = vmatprep.subr.bf16.mxu0 0
    %433 = vmatpush1.bf16.msra.mxu0 0
    %434 = vmatprep.subr.bf16.mxu0 0
    %435 = vmatpush1.bf16.msra.mxu0 0
    %436 = vmatprep.subr.bf16.mxu0 0
    %437 = vmatpush1.bf16.msra.mxu0 0
    %438 = vmatprep.subr.bf16.mxu0 0
    %439 = vmatpush1.bf16.msra.mxu0 0
    %440 = vmatprep.subr.bf16.mxu0 0
    %441 = vmatpush1.bf16.msra.mxu0 0
    %442 = vmatprep.subr.bf16.mxu0 0
    %443 = vmatpush1.bf16.msra.mxu0 0
    %444 = vmatprep.subr.bf16.mxu0 0
    %445 = vmatpush1.bf16.msra.mxu0 0
    %446 = vmatprep.subr.bf16.mxu0 0
    %447 = vmatpush1.bf16.msra.mxu0 0
    %448 = vmatprep.subr.bf16.mxu0 0
    %449 = vmatpush1.bf16.msra.mxu0 0
    %450 = vmatprep.subr.bf16.mxu0 0
    %451 = vmatpush1.bf16.msra.mxu0 0
    %452 = vmatprep.subr.bf16.mxu0 0
    %453 = vmatpush1.bf16.msra.mxu0 0
    %454 = vmatprep.mubr.bf16.mxu0 0
    %455 = vmatmul.mubr.bf16.gmra.mrb[0].mxu0 %v416
    %v456 = vpop.f32.mrb[0].mxu0
    %v457 = vadd.f32 %v404, %v456
    %v458 = vpop.f32.mrb[0].mxu0
    %v459 = vpop.f32.mrb[0].mxu0
    %v460 = vpop.f32.mrb[0].mxu0
    %461 = vdwg.mxu0
    %462 = vst [vmem:[#allocation2] sm:$0x3] %v457
    // Predicated region
    $region26: #{tpu_custom_call.1} parent=1 // pred_check
      _
    $region27: #{tpu_custom_call.1} parent=1 // pred_check_branch
      %464 = sbr.rel (0) target = $region29
    $region28: #{tpu_custom_call.1} parent=1 // pred_region
      %s466 = ssub.s32 32, 32
      %467 = vsyncadd [#allocation3], %s466
      %s469 = sshll.u32 [#allocation2], 4
      %s470 = int_to_ptr.vmem [resolvable:$true] %s469
      %472 = dma.vmem_to_hbm [thread:$0]  %s470, 32, %s6, [#allocation3]
    $region29: #{tpu_custom_call.1} parent=1 // pred_fallthru
      _
    // Predicated region
    $region30: #{tpu_custom_call.1} parent=1 // pred_check
      _
    $region31: #{tpu_custom_call.1} parent=1 // pred_check_branch
      %474 = sbr.rel (0) target = $region33
    $region32: #{tpu_custom_call.1} parent=1 // pred_region
      %475 = dma.done [#allocation3], 32
    $region33: #{tpu_custom_call.1} parent=1 // pred_fallthru
      _
    %476 = vsyncpa [#allocation3], 1

</llo_original>
